<compile_context>
chip_gen: v5e
topology: v5e:2x2
jax: 0.10.0
libtpu: 0.0.40
codegen_flags: <defaults>
</compile_context>

<pallas_src>
import functools

import jax
import jax.numpy as jnp
from jax import lax
from jax.experimental import pallas as pl
from jax.experimental.pallas import tpu as pltpu


def _round_up(x, m):
    return (x + m - 1) // m * m


def _location_matmul_kernel(x_ref, w_ref, o_ref):
    # x_ref: (row_tile, 2K)   im2col patches (rows = flattened B*T)
    # w_ref: (2K, A_pad)      fused conv+dense weight (resident across grid)
    # o_ref: (row_tile, A_pad) lane-dense output slab
    o_ref[...] = jnp.dot(
        x_ref[...], w_ref[...], preferred_element_type=jnp.float32
    ).astype(o_ref.dtype)


def location_forward(attention_weights_cat, w_conv, w_dense):
    """attention_weights_cat: (B, 2, T); w_conv: (F, 2, K); w_dense: (A, F).
    Returns (B, T, A) = Linear(Conv1d(x).transpose(1, 2))."""
    B, C, T = attention_weights_cat.shape
    F_, C2, K = w_conv.shape
    A, F2 = w_dense.shape
    assert C == 2 and C2 == 2 and F2 == F_
    assert K % 2 == 1, "only odd kernel sizes match PyTorch 'same' padding here"
    pad = (K - 1) // 2

    x = attention_weights_cat.astype(jnp.float32)
    w_conv = w_conv.astype(jnp.float32)
    w_dense = w_dense.astype(jnp.float32)

    # ---------------- wrapper-side layout prep (plain XLA glue) ----------------
    # 1) Fuse conv + dense weights into one matrix:
    #    W_fused[(k, c), a] = sum_f w_conv[f, c, k] * w_dense[a, f]
    w_fused = jnp.einsum("fck,af->kca", w_conv, w_dense).reshape(2 * K, A)

    # 2) im2col: patches[b, t, (k, c)] = x_pad[b, c, t + k]
    x_pad = jnp.pad(x, ((0, 0), (0, 0), (pad, pad)))       # (B, 2, T + K - 1)
    x_pad_t = jnp.transpose(x_pad, (0, 2, 1))               # (B, T + K - 1, 2)
    patches = jnp.stack([x_pad_t[:, k:k + T, :] for k in range(K)], axis=2)
    patches = patches.reshape(B * T, 2 * K)                 # (rows, 2K)

    # 3) TPU-friendly padding: lane-dense output (A -> multiple of 128),
    #    sublane-aligned row tiles (multiple of 8). 512-row tiles for big inputs.
    rows = B * T
    a_pad = _round_up(A, 128)
    row_tile = min(512, _round_up(rows, 8))
    rows_pad = _round_up(rows, row_tile)
    if rows_pad != rows:
        patches = jnp.pad(patches, ((0, rows_pad - rows), (0, 0)))
    if a_pad != A:
        w_fused = jnp.pad(w_fused, ((0, 0), (0, a_pad - A)))

    grid = (rows_pad // row_tile,)   # == (1,) at demo shapes: no per-step overhead

    out = pl.pallas_call(
        _location_matmul_kernel,
        out_shape=jax.ShapeDtypeStruct((rows_pad, a_pad), jnp.float32),
        grid_spec=pltpu.PrefetchScalarGridSpec(
            num_scalar_prefetch=0,
            grid=grid,
            in_specs=[
                pl.BlockSpec((row_tile, 2 * K), lambda i: (i, 0)),
                pl.BlockSpec((2 * K, a_pad), lambda i: (0, 0)),   # weight resident
            ],
            out_specs=pl.BlockSpec((row_tile, a_pad), lambda i: (i, 0)),
        ),
        compiler_params=pltpu.CompilerParams(
            dimension_semantics=("parallel",)),
    )(patches, w_fused)

    # Undo padding / flattening in the wrapper (pure layout plumbing).
    return out[:rows, :A].reshape(B, T, A)


def _reference(attention_weights_cat, w_conv, w_dense):
    K = w_conv.shape[-1]
    pad = (K - 1) // 2
    conv = lax.conv_general_dilated(
        attention_weights_cat, w_conv,
        window_strides=(1,), padding=[(pad, pad)],
        dimension_numbers=("NCH", "OIH", "NCH"))           # (B, F, T)
    proc = jnp.transpose(conv, (0, 2, 1))                   # (B, T, F)
    return proc @ w_dense.T                                 # (B, T, A)


if __name__ == "__main__":
    # Small shapes consistent with the module
    B, T = 2, 16
    attention_location_n_filters = 8
    attention_location_kernel_size = 5
    attention_dim = 32

    key = jax.random.PRNGKey(0)
    k1, k2, k3 = jax.random.split(key, 3)
    x = jax.random.normal(k1, (B, 2, T), dtype=jnp.float32)
    w_conv = jax.random.normal(
        k2, (attention_location_n_filters, 2, attention_location_kernel_size),
        dtype=jnp.float32) * 0.3
    w_dense = jax.random.normal(
        k3, (attention_dim, attention_location_n_filters),
        dtype=jnp.float32) * 0.3

    out = location_forward(x, w_conv, w_dense)
    out = jax.block_until_ready(out)

    ref = _reference(x, w_conv, w_dense)
    assert out.shape == (B, T, attention_dim)
    assert jnp.allclose(out, ref, atol=1e-4, rtol=1e-4)

    print("KERNEL_OK")
</pallas_src>

<mosaic_0001>
module attributes {stable_mosaic.version = 11 : i64} {
  func.func @_location_matmul_kernel(%arg0: i32, %arg1: memref<32x10xf32, #tpu.memory_space<vmem>>, %arg2: memref<10x128xf32, #tpu.memory_space<vmem>>, %arg3: memref<32x128xf32, #tpu.memory_space<vmem>>) attributes {dimension_semantics = [#tpu.dimension_semantics<parallel>], iteration_bounds = array<i64: 1>, scalar_prefetch = 0 : i64, scratch_operands = 0 : i64, tpu.core_type = #tpu.core_type<tc>, window_params = [{transform_indices = @transform_0, window_bounds = array<i64: 32, 10>}, {pipeline_mode = #tpu.pipeline_mode<synchronous>, transform_indices = @transform_1, window_bounds = array<i64: 10, 128>}, {transform_indices = @transform_2, window_bounds = array<i64: 32, 128>}]} {
    %c0 = arith.constant 0 : index
    %c0_0 = arith.constant 0 : index
    %0 = vector.load %arg1[%c0, %c0_0] : memref<32x10xf32, #tpu.memory_space<vmem>>, vector<32x10xf32>
    %c0_1 = arith.constant 0 : index
    %c0_2 = arith.constant 0 : index
    %1 = vector.load %arg2[%c0_1, %c0_2] : memref<10x128xf32, #tpu.memory_space<vmem>>, vector<10x128xf32>
    %cst = arith.constant dense<0.000000e+00> : vector<32x128xf32>
    %2 = tpu.matmul %0, %1, %cst {dimension_numbers = #tpu.dot_dimension_numbers<[1], [0], [0], [1], [0, 0, 1, 1], [], []>} : vector<32x10xf32>, vector<10x128xf32>, vector<32x128xf32> -> vector<32x128xf32>
    %c0_3 = arith.constant 0 : index
    %c0_4 = arith.constant 0 : index
    %3 = vector.load %arg3[%c0_3, %c0_4] : memref<32x128xf32, #tpu.memory_space<vmem>>, vector<32x128xf32>
    tpu.vector_store %arg3[%c0_3, %c0_4], %2 {strides = array<i32>} : memref<32x128xf32, #tpu.memory_space<vmem>>, vector<32x128xf32>,
    return
  }
  func.func @transform_0(%arg0: i32) -> (i32, i32) {
    %c0_i32 = arith.constant 0 : i32
    %c0_i32_0 = arith.constant 0 : i32
    return %arg0, %c0_i32 : i32, i32
  }
  func.func @transform_1(%arg0: i32) -> (i32, i32) {
    %c0_i32 = arith.constant 0 : i32
    %c0_i32_0 = arith.constant 0 : i32
    %c0_i32_1 = arith.constant 0 : i32
    return %c0_i32, %c0_i32_0 : i32, i32
  }
  func.func @transform_2(%arg0: i32) -> (i32, i32) {
    %c0_i32 = arith.constant 0 : i32
    %c0_i32_0 = arith.constant 0 : i32
    return %arg0, %c0_i32 : i32, i32
  }
}

</mosaic_0001>

<llo_original>
// kernel: tpu_custom_call.1
$region0: #{tpu_custom_call.1}
  #allocation0 [shape = 'u32[]', space=smem, size = 0x4, offset = 0x4, fixed_abs, tag = 'smem constant byte address 0x4 - core index']
  #allocation1 [shape = 'u32[72,128]{1,0:T(1,128)}', space=vmem, size = 0x9000, scoped, tag = 'internal scratch']
  %s0 = inlined_call_operand.vmem [shape: f32[32,10], index: 0, kind: input, shape index: {}]
  %s1 = inlined_call_operand.vmem [shape: f32[10,128], index: 1, kind: input, shape index: {}]
  %s2 = inlined_call_operand.hbm [shape: f32[32,128], index: 2, kind: output, shape index: {}]
  %s3 = sld [smem:[#allocation0]]
  $region18: #{tpu_custom_call.1} parent=0
    _
  %s5 = ssub.s32 1, %s3
  %s6 = scalar_select 0, %s5, %s3
  $region1: #{tpu_custom_call.1} parent=0
    #allocation2 [shape = 'u8[16384]{0}', space=vmem, size = 0x4000, scoped, tag = 'output window, operand 0, single buffered']
    #allocation3 [shape = 's32[1]{0}', space=sflag, size = 0x4, scoped, tag = 'scoped memory for tpu_custom_call.1']
    %7 = vsyncpa [#allocation3], 0
    // Predicated region
    $region2: #{tpu_custom_call.1} parent=1 // pred_check
      _
    $region3: #{tpu_custom_call.1} parent=1 // pred_check_branch
      %9 = sbr.rel (0) target = $region5
    $region4: #{tpu_custom_call.1} parent=1 // pred_region
      _
    $region5: #{tpu_custom_call.1} parent=1 // pred_fallthru
      _
    // Predicated region
    $region6: #{tpu_custom_call.1} parent=1 // pred_check
      _
    $region7: #{tpu_custom_call.1} parent=1 // pred_check_branch
      %11 = sbr.rel (0) target = $region9
    $region8: #{tpu_custom_call.1} parent=1 // pred_region
      _
    $region9: #{tpu_custom_call.1} parent=1 // pred_fallthru
      _
    %v12 = vld [vmem:[%s0] sm:$0xff]
    %v13 = vld [vmem:[%s0 + $0x8] sm:$0xff]
    %v14 = vld [vmem:[%s0 + $0x10] sm:$0xff]
    %v15 = vld [vmem:[%s0 + $0x18] sm:$0xff]
    %v16 = vld [vmem:[%s1] sm:$0xff]
    %v17 = vld [vmem:[%s1 + $0x8] sm:$0x3]
    %vm18 = vcmask 80896
    %v20 = vsel %vm18, %v12, 0
    %v23 = vsel %vm18, %v13, 0
    %v26 = vsel %vm18, %v14, 0
    %v29 = vsel %vm18, %v15, 0
    %vm31 = vcmask 1041408
    %v33 = vsel %vm31, %v17, 0
    %35 = vmatpush.msra.mxu0 0.0
    %36 = vmatpush.msra.mxu0 0.0
    %37 = vmatpush.msra.mxu0 0.0
    %38 = vmatpush.msra.mxu0 0.0
    %39 = vmatpush.msra.mxu0 0.0
    %40 = vmatpush.msra.mxu0 0.0
    %41 = vmatpush.msra.mxu0 0.0
    %42 = vmatpush.msra.mxu0 0.0
    %43 = vmatpush.msra.mxu0 0.0
    %44 = vmatpush.msra.mxu0 0.0
    %45 = vmatpush.msra.mxu0 0.0
    %46 = vmatpush.msra.mxu0 0.0
    %47 = vmatpush.msra.mxu0 0.0
    %48 = vmatpush.msra.mxu0 0.0
    %49 = vmatpush.msra.mxu0 %v33
    %50 = vmatpush.msra.mxu0 %v16
    %51 = vmatmul.f32.gmra.mxu0 %v20
    %v52 = vpop.f32.mrf.mxu0
    %v53 = vadd.f32 0.0, %v52
    %54 = vmatmul.f32.gmra.mxu0 %v23
    %v55 = vpop.f32.mrf.mxu0
    %v56 = vadd.f32 0.0, %v55
    %57 = vmatmul.f32.gmra.mxu0 %v26
    %v58 = vpop.f32.mrf.mxu0
    %v59 = vadd.f32 0.0, %v58
    %60 = vmatmul.f32.gmra.mxu0 %v29
    %v61 = vpop.f32.mrf.mxu0
    %v62 = vadd.f32 0.0, %v61
    %63 = vdwg.mxu0
    %64 = vst [vmem:[#allocation2] sm:$0xff] %v53
    %65 = vst [vmem:[#allocation2 + $0x8] sm:$0xff] %v56
    %66 = vst [vmem:[#allocation2 + $0x10] sm:$0xff] %v59
    %67 = vst [vmem:[#allocation2 + $0x18] sm:$0xff] %v62
    // Predicated region
    $region10: #{tpu_custom_call.1} parent=1 // pred_check
      _
    $region11: #{tpu_custom_call.1} parent=1 // pred_check_branch
      %69 = sbr.rel (0) target = $region13
    $region12: #{tpu_custom_call.1} parent=1 // pred_region
      %71 = vsyncadd [#allocation3], 0
      %s72 = sshll.u32 [#allocation2], 4
      %s73 = int_to_ptr.vmem [resolvable:$true] %s72
      %s74 = sshll.u32 %s2, 4
      %s75 = int_to_ptr.hbm [resolvable:$true] %s74
      %80 = dma.vmem_to_hbm [thread:$0]  %s73, 512, %s75, [#allocation3], 128, 128, 8
    $region13: #{tpu_custom_call.1} parent=1 // pred_fallthru
      _
    // Predicated region
    $region14: #{tpu_custom_call.1} parent=1 // pred_check
      _
    $region15: #{tpu_custom_call.1} parent=1 // pred_check_branch
      %82 = sbr.rel (0) target = $region17
    $region16: #{tpu_custom_call.1} parent=1 // pred_region
      %84 = dma.done [#allocation3], 512
    $region17: #{tpu_custom_call.1} parent=1 // pred_fallthru
      _
    %85 = vsyncpa [#allocation3], 1

</llo_original>
